<compile_context>
chip_gen: v7x
topology: tpu7x:2x2x1
jax: 0.10.0
libtpu: 0.0.40
codegen_flags: <defaults>
</compile_context>

<pallas_src>
import jax
import jax.numpy as jnp
from jax.experimental import pallas as pl
from jax.experimental.pallas import tpu as pltpu

VOCAB = 50          # synthetic vocab size (weight.npy stand-in)
EMBEDDING_DIM = 16  # stand-in for weight.shape[1]
HIDDEN_SIZE = 64
NUM_CLASSES = 4
BATCH_BLOCK = 8     # batch rows per grid step (f32 sublane count); raise for big batches


def rnn_lstm_kernel(tok_ref, embgate_ref, whh_ref, b_ref, wout_ref, bout_ref,
                    out_ref, gx_ref):
    """One batch block's full forward.

    tok_ref    : (T*Bp, 1)  int32 token ids, time-major within the block
    embgate_ref: (Vp, 4H)   bf16 fused embedding->gate table (emb @ W_ih^T), gates [i,f,o,g]
    whh_ref    : (H, 4H)    bf16 hidden->gates weight (transposed, gates [i,f,o,g])
    b_ref      : (1, 4H)    f32  b_ih + b_hh          (gates [i,f,o,g])
    wout_ref   : (H, Cp)    bf16 Linear weight (transposed, classes zero-padded to Cp)
    bout_ref   : (1, Cp)    f32  Linear bias (zero-padded)
    out_ref    : (Bp, Cp)   f32  logits for the last timestep
    gx_ref     : (T*Bp, 4H) f32  VMEM scratch for the hoisted input projection
    """
    Bp = out_ref.shape[0]
    TB = tok_ref.shape[0]
    T = TB // Bp
    H = whh_ref.shape[0]
    Vp = embgate_ref.shape[0]

    # ---- Fused Embedding + input projection: one bf16 MXU pass for all T steps ----
    tok = tok_ref[...]                                             # (TB, 1) int32
    vocab_iota = jax.lax.broadcasted_iota(jnp.int32, (TB, Vp), 1)
    one_hot = (vocab_iota == tok).astype(jnp.bfloat16)             # (TB, Vp), exact 0/1
    gx_ref[...] = jnp.dot(one_hot, embgate_ref[...],
                          preferred_element_type=jnp.float32) + b_ref[...]

    # ---- Serial LSTM recurrence, fully unrolled (T static). Elementwise math in f32 ----
    whh = whh_ref[...]                                             # (H, 4H) bf16
    h = jnp.zeros((Bp, H), jnp.float32)
    c = jnp.zeros((Bp, H), jnp.float32)
    for t in range(T):
        gates = gx_ref[t * Bp:(t + 1) * Bp, :] + jnp.dot(
            h.astype(jnp.bfloat16), whh, preferred_element_type=jnp.float32)
        # gate order [i, f, o, g]; sigmoid via tanh keeps one EUP op kind per step
        sig = 0.5 * (1.0 + jnp.tanh(0.5 * gates[:, :3 * H]))
        g_g = jnp.tanh(gates[:, 3 * H:])
        # H=64 gate slices sit at 64-lane offsets; the implied XLU rotates are off the
        # binding slot here (leave as-is unless a bundle dump shows them gating the MXU).
        i_g = sig[:, 0 * H:1 * H]
        f_g = sig[:, 1 * H:2 * H]
        o_g = sig[:, 2 * H:3 * H]
        c = f_g * c + i_g * g_g
        h = o_g * jnp.tanh(c)

    # Dropout(0.5) is identity in eval mode; Linear head on the last hidden state.
    out_ref[...] = (jnp.dot(h.astype(jnp.bfloat16), wout_ref[...],
                            preferred_element_type=jnp.float32) + bout_ref[...])


def prepare_params(embed_w, w_ih, w_hh, b_ih, b_hh, w_out, b_out):
    """One-time (model-load) weight prep: permute / transpose / pad / fuse OUTSIDE the jit."""
    H = w_hh.shape[1]
    V, _ = embed_w.shape
    C = w_out.shape[0]

    # PyTorch gate block order [i, f, g, o] -> kernel order [i, f, o, g]
    perm = jnp.concatenate([
        jnp.arange(0 * H, 1 * H),   # i
        jnp.arange(1 * H, 2 * H),   # f
        jnp.arange(3 * H, 4 * H),   # o
        jnp.arange(2 * H, 3 * H),   # g
    ])
    wih_t = jnp.transpose(w_ih[perm]).astype(jnp.float32)          # (E, 4H)
    whh_t = jnp.transpose(w_hh[perm]).astype(jnp.bfloat16)         # (H, 4H) bf16
    bias = ((b_ih + b_hh)[perm]).reshape(1, 4 * H).astype(jnp.float32)

    v_pad = -(-V // 128) * 128
    emb_pad = jnp.pad(embed_w.astype(jnp.float32),
                      ((0, v_pad - V), (0, 0)))                    # (Vp, E)
    # Fused embedding -> gate-preactivation table (computed in f32, stored bf16).
    embgate = jnp.dot(emb_pad, wih_t).astype(jnp.bfloat16)         # (Vp, 4H)

    c_pad = -(-C // 128) * 128                                     # lane-dense output
    wout_t = jnp.zeros((H, c_pad), jnp.bfloat16).at[:, :C].set(
        jnp.transpose(w_out).astype(jnp.bfloat16))                 # (H, Cp) bf16
    bout = jnp.zeros((1, c_pad), jnp.float32).at[:, :C].set(
        b_out.astype(jnp.float32))                                 # (1, Cp)

    return embgate, whh_t, bias, wout_t, bout


@jax.jit
def rnn_forward(tokens, embgate, whh_t, bias, wout_t, bout):
    """tokens: (B, T) int32.  Returns (B, NUM_CLASSES) float32 logits."""
    B, T = tokens.shape
    nb = -(-B // BATCH_BLOCK)            # batch blocks -> leading (parallel) grid axis
    Bp = nb * BATCH_BLOCK
    Vp, G4 = embgate.shape
    H = whh_t.shape[0]
    Cp = wout_t.shape[1]
    TB = T * BATCH_BLOCK

    # Token ids: pad batch, group into blocks, time-major within each block.
    tok_p = jnp.pad(tokens.astype(jnp.int32), ((0, Bp - B), (0, 0)))        # (Bp, T)
    tok_tm = jnp.transpose(tok_p.reshape(nb, BATCH_BLOCK, T), (0, 2, 1))    # (nb, T, Bb)
    tok_2d = tok_tm.reshape(nb * TB, 1)                                     # (nb*T*Bb, 1)

    out = pl.pallas_call(
        rnn_lstm_kernel,
        out_shape=jax.ShapeDtypeStruct((Bp, Cp), jnp.float32),
        grid=(nb,),
        in_specs=[
            pl.BlockSpec((TB, 1), lambda b: (b, 0)),          # token ids (per block)
            pl.BlockSpec((Vp, G4), lambda b: (0, 0)),         # fused emb->gate table
            pl.BlockSpec((H, G4), lambda b: (0, 0)),          # W_hh^T
            pl.BlockSpec((1, G4), lambda b: (0, 0)),          # bias
            pl.BlockSpec((H, Cp), lambda b: (0, 0)),          # W_out^T (padded)
            pl.BlockSpec((1, Cp), lambda b: (0, 0)),          # b_out (padded)
        ],
        out_specs=pl.BlockSpec((BATCH_BLOCK, Cp), lambda b: (b, 0)),
        scratch_shapes=[pltpu.VMEM((TB, G4), jnp.float32)],   # gx spill buffer
        compiler_params=pltpu.CompilerParams(
            dimension_semantics=("parallel",)),               # v7x: blocks split across TCs
    )(tok_2d, embgate, whh_t, bias, wout_t, bout)

    return out[:B, :NUM_CLASSES]


def _reference(tokens, embed_w, w_ih, w_hh, b_ih, b_hh, w_out, b_out):
    """Pure-JAX f32 reference matching torch.nn.LSTM semantics (gate order i,f,g,o)."""
    x = jnp.take(embed_w, tokens, axis=0)              # (B, T, E)
    B, T, _ = x.shape
    H = w_hh.shape[1]

    def step(carry, x_t):
        h, c = carry
        gates = x_t @ w_ih.T + b_ih + h @ w_hh.T + b_hh
        i = jax.nn.sigmoid(gates[:, 0 * H:1 * H])
        f = jax.nn.sigmoid(gates[:, 1 * H:2 * H])
        g = jnp.tanh(gates[:, 2 * H:3 * H])
        o = jax.nn.sigmoid(gates[:, 3 * H:4 * H])
        c = f * c + i * g
        h = o * jnp.tanh(c)
        return (h, c), None

    h0 = jnp.zeros((B, H), jnp.float32)
    c0 = jnp.zeros((B, H), jnp.float32)
    (h_last, _), _ = jax.lax.scan(step, (h0, c0), jnp.transpose(x, (1, 0, 2)))
    return h_last @ w_out.T + b_out


if __name__ == "__main__":
    B, T = 2, 8
    E, H, C = EMBEDDING_DIM, HIDDEN_SIZE, NUM_CLASSES

    key = jax.random.PRNGKey(0)
    keys = jax.random.split(key, 8)

    tokens = jax.random.randint(keys[0], (B, T), 0, VOCAB, dtype=jnp.int32)
    embed_w = jax.random.normal(keys[1], (VOCAB, E), jnp.float32) * 0.1
    # PyTorch LSTM parameter shapes: weight_ih (4H, E), weight_hh (4H, H), biases (4H,)
    w_ih = jax.random.normal(keys[2], (4 * H, E), jnp.float32) * 0.1
    w_hh = jax.random.normal(keys[3], (4 * H, H), jnp.float32) * 0.1
    b_ih = jax.random.normal(keys[4], (4 * H,), jnp.float32) * 0.1
    b_hh = jax.random.normal(keys[5], (4 * H,), jnp.float32) * 0.1
    # Linear(64, 4): weight (4, 64), bias (4,)
    w_out = jax.random.normal(keys[6], (C, H), jnp.float32) * 0.1
    b_out = jax.random.normal(keys[7], (C,), jnp.float32) * 0.1

    params = prepare_params(embed_w, w_ih, w_hh, b_ih, b_hh, w_out, b_out)

    logits = rnn_forward(tokens, *params)
    logits = jax.block_until_ready(logits)

    ref = _reference(tokens, embed_w, w_ih, w_hh, b_ih, b_hh, w_out, b_out)
    assert logits.shape == (B, C), logits.shape
    # bf16 MXU operands (f32 accumulate): loosened tolerance vs the pure-f32 reference.
    assert jnp.allclose(logits, ref, atol=2e-2, rtol=2e-2), (logits, ref)

    print("KERNEL_OK")
</pallas_src>

<mosaic_0001>
module attributes {stable_mosaic.version = 11 : i64} {
  func.func @rnn_lstm_kernel(%arg0: i32, %arg1: memref<64x1xi32, #tpu.memory_space<vmem>>, %arg2: memref<128x256xbf16, #tpu.memory_space<vmem>>, %arg3: memref<64x256xbf16, #tpu.memory_space<vmem>>, %arg4: memref<1x256xf32, #tpu.memory_space<vmem>>, %arg5: memref<64x128xbf16, #tpu.memory_space<vmem>>, %arg6: memref<1x128xf32, #tpu.memory_space<vmem>>, %arg7: memref<8x128xf32, #tpu.memory_space<vmem>>, %arg8: memref<64x256xf32, #tpu.memory_space<vmem>>) attributes {dimension_semantics = [#tpu.dimension_semantics<parallel>], iteration_bounds = array<i64: 1>, scalar_prefetch = 0 : i64, scratch_operands = 1 : i64, tpu.core_type = #tpu.core_type<tc>, window_params = [{transform_indices = @transform_0, window_bounds = array<i64: 64, 1>}, {pipeline_mode = #tpu.pipeline_mode<synchronous>, transform_indices = @transform_1, window_bounds = array<i64: 128, 256>}, {pipeline_mode = #tpu.pipeline_mode<synchronous>, transform_indices = @transform_2, window_bounds = array<i64: 64, 256>}, {pipeline_mode = #tpu.pipeline_mode<synchronous>, transform_indices = @transform_3, window_bounds = array<i64: 1, 256>}, {pipeline_mode = #tpu.pipeline_mode<synchronous>, transform_indices = @transform_4, window_bounds = array<i64: 64, 128>}, {pipeline_mode = #tpu.pipeline_mode<synchronous>, transform_indices = @transform_5, window_bounds = array<i64: 1, 128>}, {transform_indices = @transform_6, window_bounds = array<i64: 8, 128>}]} {
    %c0 = arith.constant 0 : index
    %c0_0 = arith.constant 0 : index
    %0 = vector.load %arg1[%c0, %c0_0] : memref<64x1xi32, #tpu.memory_space<vmem>>, vector<64x1xi32>
    %1 = tpu.iota {dimensions = array<i32: 1>} : vector<64x128xi32>
    %2 = vector.broadcast %0 : vector<64x1xi32> to vector<64x128xi32>
    %3 = arith.cmpi eq, %1, %2 : vector<64x128xi32>
    %4 = arith.extui %3 : vector<64x128xi1> to vector<64x128xi32>
    %5 = arith.sitofp %4 : vector<64x128xi32> to vector<64x128xf32>
    %6 = arith.truncf %5 : vector<64x128xf32> to vector<64x128xbf16>
    %c0_1 = arith.constant 0 : index
    %c0_2 = arith.constant 0 : index
    %7 = vector.load %arg2[%c0_1, %c0_2] : memref<128x256xbf16, #tpu.memory_space<vmem>>, vector<128x256xbf16>
    %cst = arith.constant dense<0.000000e+00> : vector<64x256xf32>
    %8 = tpu.matmul %6, %7, %cst {dimension_numbers = #tpu.dot_dimension_numbers<[1], [0], [0], [1], [0, 0, 1, 1], [], []>} : vector<64x128xbf16>, vector<128x256xbf16>, vector<64x256xf32> -> vector<64x256xf32>
    %c0_3 = arith.constant 0 : index
    %c0_4 = arith.constant 0 : index
    %9 = vector.load %arg4[%c0_3, %c0_4] : memref<1x256xf32, #tpu.memory_space<vmem>>, vector<1x256xf32>
    %10 = vector.broadcast %9 : vector<1x256xf32> to vector<64x256xf32>
    %11 = arith.addf %8, %10 : vector<64x256xf32>
    %c0_5 = arith.constant 0 : index
    %c0_6 = arith.constant 0 : index
    %12 = vector.load %arg8[%c0_5, %c0_6] : memref<64x256xf32, #tpu.memory_space<vmem>>, vector<64x256xf32>
    tpu.vector_store %arg8[%c0_5, %c0_6], %11 {strides = array<i32>} : memref<64x256xf32, #tpu.memory_space<vmem>>, vector<64x256xf32>,
    %c0_7 = arith.constant 0 : index
    %c0_8 = arith.constant 0 : index
    %13 = vector.load %arg3[%c0_7, %c0_8] : memref<64x256xbf16, #tpu.memory_space<vmem>>, vector<64x256xbf16>
    %cst_9 = arith.constant 0.000000e+00 : f32
    %14 = vector.broadcast %cst_9 : f32 to vector<8x64xf32>
    %cst_10 = arith.constant 0.000000e+00 : f32
    %15 = vector.broadcast %cst_10 : f32 to vector<8x64xf32>
    %c0_11 = arith.constant 0 : index
    %c0_12 = arith.constant 0 : index
    %16 = vector.load %arg8[%c0_11, %c0_12] : memref<64x256xf32, #tpu.memory_space<vmem>>, vector<8x256xf32>
    %17 = arith.truncf %14 : vector<8x64xf32> to vector<8x64xbf16>
    %cst_13 = arith.constant dense<0.000000e+00> : vector<8x256xf32>
    %18 = tpu.matmul %17, %13, %cst_13 {dimension_numbers = #tpu.dot_dimension_numbers<[1], [0], [0], [1], [0, 0, 1, 1], [], []>} : vector<8x64xbf16>, vector<64x256xbf16>, vector<8x256xf32> -> vector<8x256xf32>
    %19 = arith.addf %16, %18 : vector<8x256xf32>
    %20 = vector.extract_strided_slice %19 {offsets = [0, 0], sizes = [8, 192], strides = [1, 1]} : vector<8x256xf32> to vector<8x192xf32>
    %cst_14 = arith.constant 5.000000e-01 : f32
    %21 = vector.broadcast %cst_14 : f32 to vector<8x192xf32>
    %22 = arith.mulf %21, %20 : vector<8x192xf32>
    %23 = math.tanh %22 : vector<8x192xf32>
    %cst_15 = arith.constant 1.000000e+00 : f32
    %24 = vector.broadcast %cst_15 : f32 to vector<8x192xf32>
    %25 = arith.addf %24, %23 : vector<8x192xf32>
    %cst_16 = arith.constant 5.000000e-01 : f32
    %26 = vector.broadcast %cst_16 : f32 to vector<8x192xf32>
    %27 = arith.mulf %26, %25 : vector<8x192xf32>
    %28 = vector.extract_strided_slice %19 {offsets = [0, 192], sizes = [8, 64], strides = [1, 1]} : vector<8x256xf32> to vector<8x64xf32>
    %29 = math.tanh %28 : vector<8x64xf32>
    %30 = vector.extract_strided_slice %27 {offsets = [0, 0], sizes = [8, 64], strides = [1, 1]} : vector<8x192xf32> to vector<8x64xf32>
    %31 = vector.extract_strided_slice %27 {offsets = [0, 64], sizes = [8, 64], strides = [1, 1]} : vector<8x192xf32> to vector<8x64xf32>
    %32 = vector.extract_strided_slice %27 {offsets = [0, 128], sizes = [8, 64], strides = [1, 1]} : vector<8x192xf32> to vector<8x64xf32>
    %33 = arith.mulf %31, %15 : vector<8x64xf32>
    %34 = arith.mulf %30, %29 : vector<8x64xf32>
    %35 = arith.addf %33, %34 : vector<8x64xf32>
    %36 = math.tanh %35 : vector<8x64xf32>
    %37 = arith.mulf %32, %36 : vector<8x64xf32>
    %c8 = arith.constant 8 : index
    %c0_17 = arith.constant 0 : index
    %38 = vector.load %arg8[%c8, %c0_17] : memref<64x256xf32, #tpu.memory_space<vmem>>, vector<8x256xf32>
    %39 = arith.truncf %37 : vector<8x64xf32> to vector<8x64xbf16>
    %cst_18 = arith.constant dense<0.000000e+00> : vector<8x256xf32>
    %40 = tpu.matmul %39, %13, %cst_18 {dimension_numbers = #tpu.dot_dimension_numbers<[1], [0], [0], [1], [0, 0, 1, 1], [], []>} : vector<8x64xbf16>, vector<64x256xbf16>, vector<8x256xf32> -> vector<8x256xf32>
    %41 = arith.addf %38, %40 : vector<8x256xf32>
    %42 = vector.extract_strided_slice %41 {offsets = [0, 0], sizes = [8, 192], strides = [1, 1]} : vector<8x256xf32> to vector<8x192xf32>
    %cst_19 = arith.constant 5.000000e-01 : f32
    %43 = vector.broadcast %cst_19 : f32 to vector<8x192xf32>
    %44 = arith.mulf %43, %42 : vector<8x192xf32>
    %45 = math.tanh %44 : vector<8x192xf32>
    %cst_20 = arith.constant 1.000000e+00 : f32
    %46 = vector.broadcast %cst_20 : f32 to vector<8x192xf32>
    %47 = arith.addf %46, %45 : vector<8x192xf32>
    %cst_21 = arith.constant 5.000000e-01 : f32
    %48 = vector.broadcast %cst_21 : f32 to vector<8x192xf32>
    %49 = arith.mulf %48, %47 : vector<8x192xf32>
    %50 = vector.extract_strided_slice %41 {offsets = [0, 192], sizes = [8, 64], strides = [1, 1]} : vector<8x256xf32> to vector<8x64xf32>
    %51 = math.tanh %50 : vector<8x64xf32>
    %52 = vector.extract_strided_slice %49 {offsets = [0, 0], sizes = [8, 64], strides = [1, 1]} : vector<8x192xf32> to vector<8x64xf32>
    %53 = vector.extract_strided_slice %49 {offsets = [0, 64], sizes = [8, 64], strides = [1, 1]} : vector<8x192xf32> to vector<8x64xf32>
    %54 = vector.extract_strided_slice %49 {offsets = [0, 128], sizes = [8, 64], strides = [1, 1]} : vector<8x192xf32> to vector<8x64xf32>
    %55 = arith.mulf %53, %35 : vector<8x64xf32>
    %56 = arith.mulf %52, %51 : vector<8x64xf32>
    %57 = arith.addf %55, %56 : vector<8x64xf32>
    %58 = math.tanh %57 : vector<8x64xf32>
    %59 = arith.mulf %54, %58 : vector<8x64xf32>
    %c16 = arith.constant 16 : index
    %c0_22 = arith.constant 0 : index
    %60 = vector.load %arg8[%c16, %c0_22] : memref<64x256xf32, #tpu.memory_space<vmem>>, vector<8x256xf32>
    %61 = arith.truncf %59 : vector<8x64xf32> to vector<8x64xbf16>
    %cst_23 = arith.constant dense<0.000000e+00> : vector<8x256xf32>
    %62 = tpu.matmul %61, %13, %cst_23 {dimension_numbers = #tpu.dot_dimension_numbers<[1], [0], [0], [1], [0, 0, 1, 1], [], []>} : vector<8x64xbf16>, vector<64x256xbf16>, vector<8x256xf32> -> vector<8x256xf32>
    %63 = arith.addf %60, %62 : vector<8x256xf32>
    %64 = vector.extract_strided_slice %63 {offsets = [0, 0], sizes = [8, 192], strides = [1, 1]} : vector<8x256xf32> to vector<8x192xf32>
    %cst_24 = arith.constant 5.000000e-01 : f32
    %65 = vector.broadcast %cst_24 : f32 to vector<8x192xf32>
    %66 = arith.mulf %65, %64 : vector<8x192xf32>
    %67 = math.tanh %66 : vector<8x192xf32>
    %cst_25 = arith.constant 1.000000e+00 : f32
    %68 = vector.broadcast %cst_25 : f32 to vector<8x192xf32>
    %69 = arith.addf %68, %67 : vector<8x192xf32>
    %cst_26 = arith.constant 5.000000e-01 : f32
    %70 = vector.broadcast %cst_26 : f32 to vector<8x192xf32>
    %71 = arith.mulf %70, %69 : vector<8x192xf32>
    %72 = vector.extract_strided_slice %63 {offsets = [0, 192], sizes = [8, 64], strides = [1, 1]} : vector<8x256xf32> to vector<8x64xf32>
    %73 = math.tanh %72 : vector<8x64xf32>
    %74 = vector.extract_strided_slice %71 {offsets = [0, 0], sizes = [8, 64], strides = [1, 1]} : vector<8x192xf32> to vector<8x64xf32>
    %75 = vector.extract_strided_slice %71 {offsets = [0, 64], sizes = [8, 64], strides = [1, 1]} : vector<8x192xf32> to vector<8x64xf32>
    %76 = vector.extract_strided_slice %71 {offsets = [0, 128], sizes = [8, 64], strides = [1, 1]} : vector<8x192xf32> to vector<8x64xf32>
    %77 = arith.mulf %75, %57 : vector<8x64xf32>
    %78 = arith.mulf %74, %73 : vector<8x64xf32>
    %79 = arith.addf %77, %78 : vector<8x64xf32>
    %80 = math.tanh %79 : vector<8x64xf32>
    %81 = arith.mulf %76, %80 : vector<8x64xf32>
    %c24 = arith.constant 24 : index
    %c0_27 = arith.constant 0 : index
    %82 = vector.load %arg8[%c24, %c0_27] : memref<64x256xf32, #tpu.memory_space<vmem>>, vector<8x256xf32>
    %83 = arith.truncf %81 : vector<8x64xf32> to vector<8x64xbf16>
    %cst_28 = arith.constant dense<0.000000e+00> : vector<8x256xf32>
    %84 = tpu.matmul %83, %13, %cst_28 {dimension_numbers = #tpu.dot_dimension_numbers<[1], [0], [0], [1], [0, 0, 1, 1], [], []>} : vector<8x64xbf16>, vector<64x256xbf16>, vector<8x256xf32> -> vector<8x256xf32>
    %85 = arith.addf %82, %84 : vector<8x256xf32>
    %86 = vector.extract_strided_slice %85 {offsets = [0, 0], sizes = [8, 192], strides = [1, 1]} : vector<8x256xf32> to vector<8x192xf32>
    %cst_29 = arith.constant 5.000000e-01 : f32
    %87 = vector.broadcast %cst_29 : f32 to vector<8x192xf32>
    %88 = arith.mulf %87, %86 : vector<8x192xf32>
    %89 = math.tanh %88 : vector<8x192xf32>
    %cst_30 = arith.constant 1.000000e+00 : f32
    %90 = vector.broadcast %cst_30 : f32 to vector<8x192xf32>
    %91 = arith.addf %90, %89 : vector<8x192xf32>
    %cst_31 = arith.constant 5.000000e-01 : f32
    %92 = vector.broadcast %cst_31 : f32 to vector<8x192xf32>
    %93 = arith.mulf %92, %91 : vector<8x192xf32>
    %94 = vector.extract_strided_slice %85 {offsets = [0, 192], sizes = [8, 64], strides = [1, 1]} : vector<8x256xf32> to vector<8x64xf32>
    %95 = math.tanh %94 : vector<8x64xf32>
    %96 = vector.extract_strided_slice %93 {offsets = [0, 0], sizes = [8, 64], strides = [1, 1]} : vector<8x192xf32> to vector<8x64xf32>
    %97 = vector.extract_strided_slice %93 {offsets = [0, 64], sizes = [8, 64], strides = [1, 1]} : vector<8x192xf32> to vector<8x64xf32>
    %98 = vector.extract_strided_slice %93 {offsets = [0, 128], sizes = [8, 64], strides = [1, 1]} : vector<8x192xf32> to vector<8x64xf32>
    %99 = arith.mulf %97, %79 : vector<8x64xf32>
    %100 = arith.mulf %96, %95 : vector<8x64xf32>
    %101 = arith.addf %99, %100 : vector<8x64xf32>
    %102 = math.tanh %101 : vector<8x64xf32>
    %103 = arith.mulf %98, %102 : vector<8x64xf32>
    %c32 = arith.constant 32 : index
    %c0_32 = arith.constant 0 : index
    %104 = vector.load %arg8[%c32, %c0_32] : memref<64x256xf32, #tpu.memory_space<vmem>>, vector<8x256xf32>
    %105 = arith.truncf %103 : vector<8x64xf32> to vector<8x64xbf16>
    %cst_33 = arith.constant dense<0.000000e+00> : vector<8x256xf32>
    %106 = tpu.matmul %105, %13, %cst_33 {dimension_numbers = #tpu.dot_dimension_numbers<[1], [0], [0], [1], [0, 0, 1, 1], [], []>} : vector<8x64xbf16>, vector<64x256xbf16>, vector<8x256xf32> -> vector<8x256xf32>
    %107 = arith.addf %104, %106 : vector<8x256xf32>
    %108 = vector.extract_strided_slice %107 {offsets = [0, 0], sizes = [8, 192], strides = [1, 1]} : vector<8x256xf32> to vector<8x192xf32>
    %cst_34 = arith.constant 5.000000e-01 : f32
    %109 = vector.broadcast %cst_34 : f32 to vector<8x192xf32>
    %110 = arith.mulf %109, %108 : vector<8x192xf32>
    %111 = math.tanh %110 : vector<8x192xf32>
    %cst_35 = arith.constant 1.000000e+00 : f32
    %112 = vector.broadcast %cst_35 : f32 to vector<8x192xf32>
    %113 = arith.addf %112, %111 : vector<8x192xf32>
    %cst_36 = arith.constant 5.000000e-01 : f32
    %114 = vector.broadcast %cst_36 : f32 to vector<8x192xf32>
    %115 = arith.mulf %114, %113 : vector<8x192xf32>
    %116 = vector.extract_strided_slice %107 {offsets = [0, 192], sizes = [8, 64], strides = [1, 1]} : vector<8x256xf32> to vector<8x64xf32>
    %117 = math.tanh %116 : vector<8x64xf32>
    %118 = vector.extract_strided_slice %115 {offsets = [0, 0], sizes = [8, 64], strides = [1, 1]} : vector<8x192xf32> to vector<8x64xf32>
    %119 = vector.extract_strided_slice %115 {offsets = [0, 64], sizes = [8, 64], strides = [1, 1]} : vector<8x192xf32> to vector<8x64xf32>
    %120 = vector.extract_strided_slice %115 {offsets = [0, 128], sizes = [8, 64], strides = [1, 1]} : vector<8x192xf32> to vector<8x64xf32>
    %121 = arith.mulf %119, %101 : vector<8x64xf32>
    %122 = arith.mulf %118, %117 : vector<8x64xf32>
    %123 = arith.addf %121, %122 : vector<8x64xf32>
    %124 = math.tanh %123 : vector<8x64xf32>
    %125 = arith.mulf %120, %124 : vector<8x64xf32>
    %c40 = arith.constant 40 : index
    %c0_37 = arith.constant 0 : index
    %126 = vector.load %arg8[%c40, %c0_37] : memref<64x256xf32, #tpu.memory_space<vmem>>, vector<8x256xf32>
    %127 = arith.truncf %125 : vector<8x64xf32> to vector<8x64xbf16>
    %cst_38 = arith.constant dense<0.000000e+00> : vector<8x256xf32>
    %128 = tpu.matmul %127, %13, %cst_38 {dimension_numbers = #tpu.dot_dimension_numbers<[1], [0], [0], [1], [0, 0, 1, 1], [], []>} : vector<8x64xbf16>, vector<64x256xbf16>, vector<8x256xf32> -> vector<8x256xf32>
    %129 = arith.addf %126, %128 : vector<8x256xf32>
    %130 = vector.extract_strided_slice %129 {offsets = [0, 0], sizes = [8, 192], strides = [1, 1]} : vector<8x256xf32> to vector<8x192xf32>
    %cst_39 = arith.constant 5.000000e-01 : f32
    %131 = vector.broadcast %cst_39 : f32 to vector<8x192xf32>
    %132 = arith.mulf %131, %130 : vector<8x192xf32>
    %133 = math.tanh %132 : vector<8x192xf32>
    %cst_40 = arith.constant 1.000000e+00 : f32
    %134 = vector.broadcast %cst_40 : f32 to vector<8x192xf32>
    %135 = arith.addf %134, %133 : vector<8x192xf32>
    %cst_41 = arith.constant 5.000000e-01 : f32
    %136 = vector.broadcast %cst_41 : f32 to vector<8x192xf32>
    %137 = arith.mulf %136, %135 : vector<8x192xf32>
    %138 = vector.extract_strided_slice %129 {offsets = [0, 192], sizes = [8, 64], strides = [1, 1]} : vector<8x256xf32> to vector<8x64xf32>
    %139 = math.tanh %138 : vector<8x64xf32>
    %140 = vector.extract_strided_slice %137 {offsets = [0, 0], sizes = [8, 64], strides = [1, 1]} : vector<8x192xf32> to vector<8x64xf32>
    %141 = vector.extract_strided_slice %137 {offsets = [0, 64], sizes = [8, 64], strides = [1, 1]} : vector<8x192xf32> to vector<8x64xf32>
    %142 = vector.extract_strided_slice %137 {offsets = [0, 128], sizes = [8, 64], strides = [1, 1]} : vector<8x192xf32> to vector<8x64xf32>
    %143 = arith.mulf %141, %123 : vector<8x64xf32>
    %144 = arith.mulf %140, %139 : vector<8x64xf32>
    %145 = arith.addf %143, %144 : vector<8x64xf32>
    %146 = math.tanh %145 : vector<8x64xf32>
    %147 = arith.mulf %142, %146 : vector<8x64xf32>
    %c48 = arith.constant 48 : index
    %c0_42 = arith.constant 0 : index
    %148 = vector.load %arg8[%c48, %c0_42] : memref<64x256xf32, #tpu.memory_space<vmem>>, vector<8x256xf32>
    %149 = arith.truncf %147 : vector<8x64xf32> to vector<8x64xbf16>
    %cst_43 = arith.constant dense<0.000000e+00> : vector<8x256xf32>
    %150 = tpu.matmul %149, %13, %cst_43 {dimension_numbers = #tpu.dot_dimension_numbers<[1], [0], [0], [1], [0, 0, 1, 1], [], []>} : vector<8x64xbf16>, vector<64x256xbf16>, vector<8x256xf32> -> vector<8x256xf32>
    %151 = arith.addf %148, %150 : vector<8x256xf32>
    %152 = vector.extract_strided_slice %151 {offsets = [0, 0], sizes = [8, 192], strides = [1, 1]} : vector<8x256xf32> to vector<8x192xf32>
    %cst_44 = arith.constant 5.000000e-01 : f32
    %153 = vector.broadcast %cst_44 : f32 to vector<8x192xf32>
    %154 = arith.mulf %153, %152 : vector<8x192xf32>
    %155 = math.tanh %154 : vector<8x192xf32>
    %cst_45 = arith.constant 1.000000e+00 : f32
    %156 = vector.broadcast %cst_45 : f32 to vector<8x192xf32>
    %157 = arith.addf %156, %155 : vector<8x192xf32>
    %cst_46 = arith.constant 5.000000e-01 : f32
    %158 = vector.broadcast %cst_46 : f32 to vector<8x192xf32>
    %159 = arith.mulf %158, %157 : vector<8x192xf32>
    %160 = vector.extract_strided_slice %151 {offsets = [0, 192], sizes = [8, 64], strides = [1, 1]} : vector<8x256xf32> to vector<8x64xf32>
    %161 = math.tanh %160 : vector<8x64xf32>
    %162 = vector.extract_strided_slice %159 {offsets = [0, 0], sizes = [8, 64], strides = [1, 1]} : vector<8x192xf32> to vector<8x64xf32>
    %163 = vector.extract_strided_slice %159 {offsets = [0, 64], sizes = [8, 64], strides = [1, 1]} : vector<8x192xf32> to vector<8x64xf32>
    %164 = vector.extract_strided_slice %159 {offsets = [0, 128], sizes = [8, 64], strides = [1, 1]} : vector<8x192xf32> to vector<8x64xf32>
    %165 = arith.mulf %163, %145 : vector<8x64xf32>
    %166 = arith.mulf %162, %161 : vector<8x64xf32>
    %167 = arith.addf %165, %166 : vector<8x64xf32>
    %168 = math.tanh %167 : vector<8x64xf32>
    %169 = arith.mulf %164, %168 : vector<8x64xf32>
    %c56 = arith.constant 56 : index
    %c0_47 = arith.constant 0 : index
    %170 = vector.load %arg8[%c56, %c0_47] : memref<64x256xf32, #tpu.memory_space<vmem>>, vector<8x256xf32>
    %171 = arith.truncf %169 : vector<8x64xf32> to vector<8x64xbf16>
    %cst_48 = arith.constant dense<0.000000e+00> : vector<8x256xf32>
    %172 = tpu.matmul %171, %13, %cst_48 {dimension_numbers = #tpu.dot_dimension_numbers<[1], [0], [0], [1], [0, 0, 1, 1], [], []>} : vector<8x64xbf16>, vector<64x256xbf16>, vector<8x256xf32> -> vector<8x256xf32>
    %173 = arith.addf %170, %172 : vector<8x256xf32>
    %174 = vector.extract_strided_slice %173 {offsets = [0, 0], sizes = [8, 192], strides = [1, 1]} : vector<8x256xf32> to vector<8x192xf32>
    %cst_49 = arith.constant 5.000000e-01 : f32
    %175 = vector.broadcast %cst_49 : f32 to vector<8x192xf32>
    %176 = arith.mulf %175, %174 : vector<8x192xf32>
    %177 = math.tanh %176 : vector<8x192xf32>
    %cst_50 = arith.constant 1.000000e+00 : f32
    %178 = vector.broadcast %cst_50 : f32 to vector<8x192xf32>
    %179 = arith.addf %178, %177 : vector<8x192xf32>
    %cst_51 = arith.constant 5.000000e-01 : f32
    %180 = vector.broadcast %cst_51 : f32 to vector<8x192xf32>
    %181 = arith.mulf %180, %179 : vector<8x192xf32>
    %182 = vector.extract_strided_slice %173 {offsets = [0, 192], sizes = [8, 64], strides = [1, 1]} : vector<8x256xf32> to vector<8x64xf32>
    %183 = math.tanh %182 : vector<8x64xf32>
    %184 = vector.extract_strided_slice %181 {offsets = [0, 0], sizes = [8, 64], strides = [1, 1]} : vector<8x192xf32> to vector<8x64xf32>
    %185 = vector.extract_strided_slice %181 {offsets = [0, 64], sizes = [8, 64], strides = [1, 1]} : vector<8x192xf32> to vector<8x64xf32>
    %186 = vector.extract_strided_slice %181 {offsets = [0, 128], sizes = [8, 64], strides = [1, 1]} : vector<8x192xf32> to vector<8x64xf32>
    %187 = arith.mulf %185, %167 : vector<8x64xf32>
    %188 = arith.mulf %184, %183 : vector<8x64xf32>
    %189 = arith.addf %187, %188 : vector<8x64xf32>
    %190 = math.tanh %189 : vector<8x64xf32>
    %191 = arith.mulf %186, %190 : vector<8x64xf32>
    %192 = arith.truncf %191 : vector<8x64xf32> to vector<8x64xbf16>
    %c0_52 = arith.constant 0 : index
    %c0_53 = arith.constant 0 : index
    %193 = vector.load %arg5[%c0_52, %c0_53] : memref<64x128xbf16, #tpu.memory_space<vmem>>, vector<64x128xbf16>
    %cst_54 = arith.constant dense<0.000000e+00> : vector<8x128xf32>
    %194 = tpu.matmul %192, %193, %cst_54 {dimension_numbers = #tpu.dot_dimension_numbers<[1], [0], [0], [1], [0, 0, 1, 1], [], []>} : vector<8x64xbf16>, vector<64x128xbf16>, vector<8x128xf32> -> vector<8x128xf32>
    %c0_55 = arith.constant 0 : index
    %c0_56 = arith.constant 0 : index
    %195 = vector.load %arg6[%c0_55, %c0_56] : memref<1x128xf32, #tpu.memory_space<vmem>>, vector<1x128xf32>
    %196 = vector.broadcast %195 : vector<1x128xf32> to vector<8x128xf32>
    %197 = arith.addf %194, %196 : vector<8x128xf32>
    %c0_57 = arith.constant 0 : index
    %c0_58 = arith.constant 0 : index
    %198 = vector.load %arg7[%c0_57, %c0_58] : memref<8x128xf32, #tpu.memory_space<vmem>>, vector<8x128xf32>
    tpu.vector_store %arg7[%c0_57, %c0_58], %197 {strides = array<i32>} : memref<8x128xf32, #tpu.memory_space<vmem>>, vector<8x128xf32>,
    return
  }
  func.func @transform_0(%arg0: i32) -> (i32, i32) {
    %c0_i32 = arith.constant 0 : i32
    %c0_i32_0 = arith.constant 0 : i32
    return %arg0, %c0_i32 : i32, i32
  }
  func.func @transform_1(%arg0: i32) -> (i32, i32) {
    %c0_i32 = arith.constant 0 : i32
    %c0_i32_0 = arith.constant 0 : i32
    %c0_i32_1 = arith.constant 0 : i32
    return %c0_i32, %c0_i32_0 : i32, i32
  }
  func.func @transform_2(%arg0: i32) -> (i32, i32) {
    %c0_i32 = arith.constant 0 : i32
    %c0_i32_0 = arith.constant 0 : i32
    %c0_i32_1 = arith.constant 0 : i32
    return %c0_i32, %c0_i32_0 : i32, i32
  }
  func.func @transform_3(%arg0: i32) -> (i32, i32) {
    %c0_i32 = arith.constant 0 : i32
    %c0_i32_0 = arith.constant 0 : i32
    %c0_i32_1 = arith.constant 0 : i32
    return %c0_i32, %c0_i32_0 : i32, i32
  }
  func.func @transform_4(%arg0: i32) -> (i32, i32) {
    %c0_i32 = arith.constant 0 : i32
    %c0_i32_0 = arith.constant 0 : i32
    %c0_i32_1 = arith.constant 0 : i32
    return %c0_i32, %c0_i32_0 : i32, i32
  }
  func.func @transform_5(%arg0: i32) -> (i32, i32) {
    %c0_i32 = arith.constant 0 : i32
    %c0_i32_0 = arith.constant 0 : i32
    %c0_i32_1 = arith.constant 0 : i32
    return %c0_i32, %c0_i32_0 : i32, i32
  }
  func.func @transform_6(%arg0: i32) -> (i32, i32) {
    %c0_i32 = arith.constant 0 : i32
    %c0_i32_0 = arith.constant 0 : i32
    return %arg0, %c0_i32 : i32, i32
  }
}

</mosaic_0001>

<llo_original>
// kernel: rnn_forward.1
$region0: #{rnn_forward.1}
  #allocation0 [shape = 'u32[]', space=smem, size = 0x4, offset = 0x4, fixed_abs, tag = 'smem constant byte address 0x4 - core index']
  #allocation1 [shape = 'u32[144,128]{1,0:T(1,128)}', space=vmem, size = 0x12000, scoped, tag = 'internal scratch']
  #allocation2 [shape = 'f32[64,256]{1,0:T(8,128)}', space=vmem, size = 0x10000, scoped, tag = 'scratch operand']
  %s0 = inlined_call_operand.vmem [shape: s32[64,1], index: 0, kind: input, shape index: {}]
  %s1 = inlined_call_operand.hbm [shape: bf16[128,256], index: 1, kind: input, shape index: {}]
  %s2 = inlined_call_operand.vmem [shape: bf16[64,256], index: 2, kind: input, shape index: {}]
  %s3 = inlined_call_operand.vmem [shape: f32[1,256], index: 3, kind: input, shape index: {}]
  %s4 = inlined_call_operand.vmem [shape: bf16[64,128], index: 4, kind: input, shape index: {}]
  %s5 = inlined_call_operand.vmem [shape: f32[1,128], index: 5, kind: input, shape index: {}]
  %s6 = inlined_call_operand.vmem [shape: f32[8,128], index: 6, kind: output, shape index: {}]
  %s7 = sld [smem:[#allocation0]]
  $region38: #{rnn_forward.1} parent=0
    _
  %s9 = ssub.s32 1, %s7
  %s10 = scalar_select 0, %s9, %s7
  $region1: #{rnn_forward.1} parent=0
    #allocation3 [shape = 'u8[65536]{0}', space=vmem, size = 0x10000, scoped, tag = 'input window, operand 1, single buffered']
    #allocation4 [shape = 's32[1]{0}', space=sflag, size = 0x4, scoped, tag = 'scoped memory for rnn_forward.1']
    %11 = vsyncpa [#allocation4], 0
    // Predicated region
    $region2: #{rnn_forward.1} parent=1 // pred_check
      _
    $region3: #{rnn_forward.1} parent=1 // pred_check_branch
      %13 = sbr.rel (0) target = $region5
    $region4: #{rnn_forward.1} parent=1 // pred_region
      _
    $region5: #{rnn_forward.1} parent=1 // pred_fallthru
      _
    // Predicated region
    $region6: #{rnn_forward.1} parent=1 // pred_check
      _
    $region7: #{rnn_forward.1} parent=1 // pred_check_branch
      %15 = sbr.rel (0) target = $region9
    $region8: #{rnn_forward.1} parent=1 // pred_region
      %s17 = ssub.s32 2048, 2048
      %18 = vsyncadd [#allocation4], %s17
      %s19 = sshll.u32 [#allocation3], 4
      %s20 = int_to_ptr.vmem [resolvable:$true] %s19
      %25 = dma.hbm_to_vmem [thread:$0]  %s1, 2048, %s20, [#allocation4], 128, 128, 8
    $region9: #{rnn_forward.1} parent=1 // pred_fallthru
      _
    // Predicated region
    $region10: #{rnn_forward.1} parent=1 // pred_check
      _
    $region11: #{rnn_forward.1} parent=1 // pred_check_branch
      %27 = sbr.rel (0) target = $region13
    $region12: #{rnn_forward.1} parent=1 // pred_region
      _
    $region13: #{rnn_forward.1} parent=1 // pred_fallthru
      _
    // Predicated region
    $region14: #{rnn_forward.1} parent=1 // pred_check
      _
    $region15: #{rnn_forward.1} parent=1 // pred_check_branch
      %29 = sbr.rel (0) target = $region17
    $region16: #{rnn_forward.1} parent=1 // pred_region
      _
    $region17: #{rnn_forward.1} parent=1 // pred_fallthru
      _
    // Predicated region
    $region18: #{rnn_forward.1} parent=1 // pred_check
      _
    $region19: #{rnn_forward.1} parent=1 // pred_check_branch
      %31 = sbr.rel (0) target = $region21
    $region20: #{rnn_forward.1} parent=1 // pred_region
      _
    $region21: #{rnn_forward.1} parent=1 // pred_fallthru
      _
    // Predicated region
    $region22: #{rnn_forward.1} parent=1 // pred_check
      _
    $region23: #{rnn_forward.1} parent=1 // pred_check_branch
      %33 = sbr.rel (0) target = $region25
    $region24: #{rnn_forward.1} parent=1 // pred_region
      _
    $region25: #{rnn_forward.1} parent=1 // pred_fallthru
      _
    // Predicated region
    $region26: #{rnn_forward.1} parent=1 // pred_check
      _
    $region27: #{rnn_forward.1} parent=1 // pred_check_branch
      %35 = sbr.rel (0) target = $region29
    $region28: #{rnn_forward.1} parent=1 // pred_region
      %36 = dma.done [#allocation4], 2048
    $region29: #{rnn_forward.1} parent=1 // pred_fallthru
      _
    %v38 = vld [vmem:[%s0] sm:$0xff]
    %v39 = vld [vmem:[%s0 + $0x8] sm:$0xff]
    %v40 = vld [vmem:[%s0 + $0x10] sm:$0xff]
    %v41 = vld [vmem:[%s0 + $0x18] sm:$0xff]
    %v42 = vld [vmem:[%s0 + $0x20] sm:$0xff]
    %v43 = vld [vmem:[%s0 + $0x28] sm:$0xff]
    %v44 = vld [vmem:[%s0 + $0x30] sm:$0xff]
    %v45 = vld [vmem:[%s0 + $0x38] sm:$0xff]
    %v46 = vlaneseq
    %v47 = vand.u32 %v46, 127
    %48 = vset.pattern.permute.xlu0 0
    %49 = vperm.xlu0 %48, %v38
    %v50 = vpop.permute.xlu0 %49
    %51 = vset.pattern.permute.xlu0 0
    %52 = vperm.xlu0 %51, %v39
    %v53 = vpop.permute.xlu0 %52
    %54 = vset.pattern.permute.xlu0 0
    %55 = vperm.xlu0 %54, %v40
    %v56 = vpop.permute.xlu0 %55
    %57 = vset.pattern.permute.xlu0 0
    %58 = vperm.xlu0 %57, %v41
    %v59 = vpop.permute.xlu0 %58
    %60 = vset.pattern.permute.xlu0 0
    %61 = vperm.xlu0 %60, %v42
    %v62 = vpop.permute.xlu0 %61
    %63 = vset.pattern.permute.xlu0 0
    %64 = vperm.xlu0 %63, %v43
    %v65 = vpop.permute.xlu0 %64
    %66 = vset.pattern.permute.xlu0 0
    %67 = vperm.xlu0 %66, %v44
    %v68 = vpop.permute.xlu0 %67
    %69 = vset.pattern.permute.xlu0 0
    %70 = vperm.xlu0 %69, %v45
    %v71 = vpop.permute.xlu0 %70
    %vm72 = vcmp.eq.s32.totalorder %v47, %v50
    %vm73 = vcmp.eq.s32.totalorder %v47, %v53
    %vm74 = vcmp.eq.s32.totalorder %v47, %v56
    %vm75 = vcmp.eq.s32.totalorder %v47, %v59
    %vm76 = vcmp.eq.s32.totalorder %v47, %v62
    %vm77 = vcmp.eq.s32.totalorder %v47, %v65
    %vm78 = vcmp.eq.s32.totalorder %v47, %v68
    %vm79 = vcmp.eq.s32.totalorder %v47, %v71
    %v80 = vsel %vm72, 1, 0
    %v81 = vsel %vm73, 1, 0
    %v82 = vsel %vm74, 1, 0
    %v83 = vsel %vm75, 1, 0
    %v84 = vsel %vm76, 1, 0
    %v85 = vsel %vm77, 1, 0
    %v86 = vsel %vm78, 1, 0
    %v87 = vsel %vm79, 1, 0
    %v88 = vcvt.s32.f32 %v80
    %v89 = vcvt.s32.f32 %v81
    %v90 = vcvt.s32.f32 %v82
    %v91 = vcvt.s32.f32 %v83
    %v92 = vcvt.s32.f32 %v84
    %v93 = vcvt.s32.f32 %v85
    %v94 = vcvt.s32.f32 %v86
    %v95 = vcvt.s32.f32 %v87
    %v96 = vpack.c.bf16 %v89, %v88
    %v97 = vpack.c.bf16 %v91, %v90
    %v98 = vpack.c.bf16 %v93, %v92
    %v99 = vpack.c.bf16 %v95, %v94
    %v100 = vld [vmem:[#allocation3] sm:$0xff]
    %v101 = vld [vmem:[#allocation3 + $0x8] sm:$0xff]
    %v102 = vld [vmem:[#allocation3 + $0x10] sm:$0xff]
    %v103 = vld [vmem:[#allocation3 + $0x18] sm:$0xff]
    %v104 = vld [vmem:[#allocation3 + $0x20] sm:$0xff]
    %v105 = vld [vmem:[#allocation3 + $0x28] sm:$0xff]
    %v106 = vld [vmem:[#allocation3 + $0x30] sm:$0xff]
    %v107 = vld [vmem:[#allocation3 + $0x38] sm:$0xff]
    %v108 = vld [vmem:[#allocation3 + $0x40] sm:$0xff]
    %v109 = vld [vmem:[#allocation3 + $0x48] sm:$0xff]
    %v110 = vld [vmem:[#allocation3 + $0x50] sm:$0xff]
    %v111 = vld [vmem:[#allocation3 + $0x58] sm:$0xff]
    %v112 = vld [vmem:[#allocation3 + $0x60] sm:$0xff]
    %v113 = vld [vmem:[#allocation3 + $0x68] sm:$0xff]
    %v114 = vld [vmem:[#allocation3 + $0x70] sm:$0xff]
    %v115 = vld [vmem:[#allocation3 + $0x78] sm:$0xff]
    %v116 = vld [vmem:[%s3] sm:$0x3]
    %v118 = vlaneseq
    %v119 = vshrl.u32 %v118, 7
    %v120 = vsub.s32 0, %v119
    %v121 = vrot.slane %v116, %v120
    %v122 = vlaneseq
    %v123 = vshrl.u32 %v122, 7
    %v124 = vsub.s32 1, %v123
    %v125 = vrot.slane %v116, %v124
    %v144 = vunpack.c.l.b16 %v100
    %v145 = vunpack.c.h.b16 %v100
    %v146 = vunpack.c.l.b16 %v101
    %v147 = vunpack.c.h.b16 %v101
    %v148 = vunpack.c.l.b16 %v102
    %v149 = vunpack.c.h.b16 %v102
    %v150 = vunpack.c.l.b16 %v103
    %v151 = vunpack.c.h.b16 %v103
    %v152 = vunpack.c.l.b16 %v104
    %v153 = vunpack.c.h.b16 %v104
    %v154 = vunpack.c.l.b16 %v105
    %v155 = vunpack.c.h.b16 %v105
    %v156 = vunpack.c.l.b16 %v106
    %v157 = vunpack.c.h.b16 %v106
    %v158 = vunpack.c.l.b16 %v107
    %v159 = vunpack.c.h.b16 %v107
    %v160 = vunpack.c.l.b16 %v108
    %v161 = vunpack.c.h.b16 %v108
    %v162 = vunpack.c.l.b16 %v109
    %v163 = vunpack.c.h.b16 %v109
    %v164 = vunpack.c.l.b16 %v110
    %v165 = vunpack.c.h.b16 %v110
    %v166 = vunpack.c.l.b16 %v111
    %v167 = vunpack.c.h.b16 %v111
    %v168 = vunpack.c.l.b16 %v112
    %v169 = vunpack.c.h.b16 %v112
    %v170 = vunpack.c.l.b16 %v113
    %v171 = vunpack.c.h.b16 %v113
    %v172 = vunpack.c.l.b16 %v114
    %v173 = vunpack.c.h.b16 %v114
    %v174 = vunpack.c.l.b16 %v115
    %v175 = vunpack.c.h.b16 %v115
    %v176 = vpack.c.b16 %v146, %v144
    %v177 = vpack.c.b16 %v147, %v145
    %v178 = vpack.c.b16 %v150, %v148
    %v179 = vpack.c.b16 %v151, %v149
    %v180 = vpack.c.b16 %v154, %v152
    %v181 = vpack.c.b16 %v155, %v153
    %v182 = vpack.c.b16 %v158, %v156
    %v183 = vpack.c.b16 %v159, %v157
    %v184 = vpack.c.b16 %v162, %v160
    %v185 = vpack.c.b16 %v163, %v161
    %v186 = vpack.c.b16 %v166, %v164
    %v187 = vpack.c.b16 %v167, %v165
    %v188 = vpack.c.b16 %v170, %v168
    %v189 = vpack.c.b16 %v171, %v169
    %v190 = vpack.c.b16 %v174, %v172
    %v191 = vpack.c.b16 %v175, %v173
    %208 = vmatprep.subr.bf16.mxu0 %v177
    %209 = vmatpush1.bf16.msra.mxu0 %v176
    %210 = vmatprep.subr.bf16.mxu0 %v179
    %211 = vmatpush1.bf16.msra.mxu0 %v178
    %212 = vmatprep.subr.bf16.mxu0 %v181
    %213 = vmatpush1.bf16.msra.mxu0 %v180
    %214 = vmatprep.subr.bf16.mxu0 %v183
    %215 = vmatpush1.bf16.msra.mxu0 %v182
    %216 = vmatprep.subr.bf16.mxu0 %v185
    %217 = vmatpush1.bf16.msra.mxu0 %v184
    %218 = vmatprep.subr.bf16.mxu0 %v187
    %219 = vmatpush1.bf16.msra.mxu0 %v186
    %220 = vmatprep.subr.bf16.mxu0 %v189
    %221 = vmatpush1.bf16.msra.mxu0 %v188
    %222 = vmatprep.subr.bf16.mxu0 %v191
    %223 = vmatpush1.bf16.msra.mxu0 %v190
    %224 = vmatprep.subr.bf16.mxu0 0
    %225 = vmatpush1.bf16.msra.mxu0 0
    %226 = vmatprep.subr.bf16.mxu0 0
    %227 = vmatpush1.bf16.msra.mxu0 0
    %228 = vmatprep.subr.bf16.mxu0 0
    %229 = vmatpush1.bf16.msra.mxu0 0
    %230 = vmatprep.subr.bf16.mxu0 0
    %231 = vmatpush1.bf16.msra.mxu0 0
    %232 = vmatprep.subr.bf16.mxu0 0
    %233 = vmatpush1.bf16.msra.mxu0 0
    %234 = vmatprep.subr.bf16.mxu0 0
    %235 = vmatpush1.bf16.msra.mxu0 0
    %236 = vmatprep.subr.bf16.mxu0 0
    %237 = vmatpush1.bf16.msra.mxu0 0
    %238 = vmatprep.subr.bf16.mxu0 0
    %239 = vmatpush1.bf16.msra.mxu0 0
    %240 = vmatprep.mubr.bf16.mxu0 0
    %241 = vmatmul.mubr.bf16.gmra.mrb[0].mxu0 %v96
    %v242 = vpop.f32.mrb[0].mxu0
    %v243 = vadd.f32 %v121, %v242
    %v244 = vpop.f32.mrb[0].mxu0
    %v245 = vadd.f32 %v125, %v244
    %v246 = vpop.f32.mrb[0].mxu0
    %v247 = vadd.f32 %v121, %v246
    %v248 = vpop.f32.mrb[0].mxu0
    %v249 = vadd.f32 %v125, %v248
    %250 = vmatprep.mubr.bf16.mxu0 0
    %251 = vmatmul.mubr.bf16.gmra.mrb[0].mxu0 %v97
    %v252 = vpop.f32.mrb[0].mxu0
    %v253 = vadd.f32 %v121, %v252
    %v254 = vpop.f32.mrb[0].mxu0
    %v255 = vadd.f32 %v125, %v254
    %v256 = vpop.f32.mrb[0].mxu0
    %v257 = vadd.f32 %v121, %v256
    %v258 = vpop.f32.mrb[0].mxu0
    %v259 = vadd.f32 %v125, %v258
    %260 = vmatprep.mubr.bf16.mxu0 0
    %261 = vmatmul.mubr.bf16.gmra.mrb[0].mxu0 %v98
    %v262 = vpop.f32.mrb[0].mxu0
    %v263 = vadd.f32 %v121, %v262
    %v264 = vpop.f32.mrb[0].mxu0
    %v265 = vadd.f32 %v125, %v264
    %v266 = vpop.f32.mrb[0].mxu0
    %v267 = vadd.f32 %v121, %v266
    %v268 = vpop.f32.mrb[0].mxu0
    %v269 = vadd.f32 %v125, %v268
    %270 = vmatprep.mubr.bf16.mxu0 0
    %271 = vmatmul.mubr.bf16.gmra.mrb[0].mxu0 %v99
    %v272 = vpop.f32.mrb[0].mxu0
    %v273 = vadd.f32 %v121, %v272
    %v274 = vpop.f32.mrb[0].mxu0
    %v275 = vadd.f32 %v125, %v274
    %v276 = vpop.f32.mrb[0].mxu0
    %v277 = vadd.f32 %v121, %v276
    %v278 = vpop.f32.mrb[0].mxu0
    %v279 = vadd.f32 %v125, %v278
    %280 = vdwg.mxu0
    %281 = vst [vmem:[#allocation2] sm:$0xff] %v243
    %282 = vst [vmem:[#allocation2 + $0x8] sm:$0xff] %v245
    %283 = vst [vmem:[#allocation2 + $0x10] sm:$0xff] %v247
    %284 = vst [vmem:[#allocation2 + $0x18] sm:$0xff] %v249
    %285 = vst [vmem:[#allocation2 + $0x20] sm:$0xff] %v253
    %286 = vst [vmem:[#allocation2 + $0x28] sm:$0xff] %v255
    %287 = vst [vmem:[#allocation2 + $0x30] sm:$0xff] %v257
    %288 = vst [vmem:[#allocation2 + $0x38] sm:$0xff] %v259
    %289 = vst [vmem:[#allocation2 + $0x40] sm:$0xff] %v263
    %290 = vst [vmem:[#allocation2 + $0x48] sm:$0xff] %v265
    %291 = vst [vmem:[#allocation2 + $0x50] sm:$0xff] %v267
    %292 = vst [vmem:[#allocation2 + $0x58] sm:$0xff] %v269
    %293 = vst [vmem:[#allocation2 + $0x60] sm:$0xff] %v273
    %294 = vst [vmem:[#allocation2 + $0x68] sm:$0xff] %v275
    %295 = vst [vmem:[#allocation2 + $0x70] sm:$0xff] %v277
    %296 = vst [vmem:[#allocation2 + $0x78] sm:$0xff] %v279
    %v297 = vld [vmem:[%s2] sm:$0xff]
    %v298 = vld [vmem:[%s2 + $0x8] sm:$0xff]
    %v299 = vld [vmem:[%s2 + $0x10] sm:$0xff]
    %v300 = vld [vmem:[%s2 + $0x18] sm:$0xff]
    %v301 = vld [vmem:[%s2 + $0x20] sm:$0xff]
    %v302 = vld [vmem:[%s2 + $0x28] sm:$0xff]
    %v303 = vld [vmem:[%s2 + $0x30] sm:$0xff]
    %v304 = vld [vmem:[%s2 + $0x38] sm:$0xff]
    %v305 = vld [vmem:[#allocation2] sm:$0xff]
    %v306 = vld [vmem:[#allocation2 + $0x8] sm:$0xff]
    %v315 = vunpack.c.l.b16 %v297
    %v316 = vunpack.c.h.b16 %v297
    %v317 = vunpack.c.l.b16 %v298
    %v318 = vunpack.c.h.b16 %v298
    %v319 = vunpack.c.l.b16 %v299
    %v320 = vunpack.c.h.b16 %v299
    %v321 = vunpack.c.l.b16 %v300
    %v322 = vunpack.c.h.b16 %v300
    %v323 = vunpack.c.l.b16 %v301
    %v324 = vunpack.c.h.b16 %v301
    %v325 = vunpack.c.l.b16 %v302
    %v326 = vunpack.c.h.b16 %v302
    %v327 = vunpack.c.l.b16 %v303
    %v328 = vunpack.c.h.b16 %v303
    %v329 = vunpack.c.l.b16 %v304
    %v330 = vunpack.c.h.b16 %v304
    %v331 = vpack.c.b16 %v317, %v315
    %v332 = vpack.c.b16 %v318, %v316
    %v333 = vpack.c.b16 %v321, %v319
    %v334 = vpack.c.b16 %v322, %v320
    %v335 = vpack.c.b16 %v325, %v323
    %v336 = vpack.c.b16 %v326, %v324
    %v337 = vpack.c.b16 %v329, %v327
    %v338 = vpack.c.b16 %v330, %v328
    %vm347 = vcmask 523264
    %v349 = vsel %vm347, 0, 0
    %351 = vmatprep.subr.bf16.mxu0 %v332
    %352 = vmatpush1.bf16.msra.mxu0 %v331
    %353 = vmatprep.subr.bf16.mxu0 %v334
    %354 = vmatpush1.bf16.msra.mxu0 %v333
    %355 = vmatprep.subr.bf16.mxu0 %v336
    %356 = vmatpush1.bf16.msra.mxu0 %v335
    %357 = vmatprep.subr.bf16.mxu0 %v338
    %358 = vmatpush1.bf16.msra.mxu0 %v337
    %359 = vmatprep.subr.bf16.mxu0 0
    %360 = vmatpush1.bf16.msra.mxu0 0
    %361 = vmatprep.subr.bf16.mxu0 0
    %362 = vmatpush1.bf16.msra.mxu0 0
    %363 = vmatprep.subr.bf16.mxu0 0
    %364 = vmatpush1.bf16.msra.mxu0 0
    %365 = vmatprep.subr.bf16.mxu0 0
    %366 = vmatpush1.bf16.msra.mxu0 0
    %367 = vmatprep.subr.bf16.mxu0 0
    %368 = vmatpush1.bf16.msra.mxu0 0
    %369 = vmatprep.subr.bf16.mxu0 0
    %370 = vmatpush1.bf16.msra.mxu0 0
    %371 = vmatprep.subr.bf16.mxu0 0
    %372 = vmatpush1.bf16.msra.mxu0 0
    %373 = vmatprep.subr.bf16.mxu0 0
    %374 = vmatpush1.bf16.msra.mxu0 0
    %375 = vmatprep.subr.bf16.mxu0 0
    %376 = vmatpush1.bf16.msra.mxu0 0
    %377 = vmatprep.subr.bf16.mxu0 0
    %378 = vmatpush1.bf16.msra.mxu0 0
    %379 = vmatprep.subr.bf16.mxu0 0
    %380 = vmatpush1.bf16.msra.mxu0 0
    %381 = vmatprep.subr.bf16.mxu0 0
    %382 = vmatpush1.bf16.msra.mxu0 0
    %383 = vmatprep.mubr.bf16.mxu0 0
    %384 = vmatmul.mubr.bf16.gmra.mrb[0].mxu0 %v349
    %v385 = vpop.f32.mrb[0].mxu0
    %v386 = vadd.f32 0.0, %v385
    %v387 = vpop.f32.mrb[0].mxu0
    %v388 = vadd.f32 0.0, %v387
    %v389 = vpop.f32.mrb[0].mxu0
    %v390 = vpop.f32.mrb[0].mxu0
    %391 = vdwg.mxu0
    %v392 = vadd.f32 %v305, %v386
    %v393 = vadd.f32 %v306, %v388
    %v394 = vmul.f32 %v392, 0.5
    %v395 = vmul.f32 %v393, 0.5
    %v396 = vtanh.pop %v394
    %v397 = vtanh.pop %v395
    %v398 = vadd.f32 %v396, 1.0
    %v399 = vadd.f32 %v397, 1.0
    %v400 = vmul.f32 %v398, 0.5
    %v401 = vmul.f32 %v399, 0.5
    %v402 = vtanh.pop %v393
    %v403 = vmul.f32 %v400, 0.0
    %405 = vrot.lane.b32.xlu0 %v402, 64
    %v406 = vpop.permute.xlu0 %405
    %v408 = vmul.f32 %v400, %v406
    %410 = vrot.lane.b32.xlu0 %v408, 64
    %v411 = vpop.permute.xlu0 %410
    %v413 = vadd.f32 %v403, %v411
    %v414 = vtanh.pop %v413
    %416 = vrot.lane.b32.xlu0 %v414, 64
    %v417 = vpop.permute.xlu0 %416
    %v419 = vmul.f32 %v401, %v417
    %v420 = vld [vmem:[#allocation2 + $0x10] sm:$0xff]
    %v421 = vld [vmem:[#allocation2 + $0x18] sm:$0xff]
    %v422 = vpack.c.bf16 %v419, %v419
    %v424 = vsel %vm347, %v422, 0
    %426 = vmatprep.subr.bf16.mxu0 %v332
    %427 = vmatpush1.bf16.msra.mxu0 %v331
    %428 = vmatprep.subr.bf16.mxu0 %v334
    %429 = vmatpush1.bf16.msra.mxu0 %v333
    %430 = vmatprep.subr.bf16.mxu0 %v336
    %431 = vmatpush1.bf16.msra.mxu0 %v335
    %432 = vmatprep.subr.bf16.mxu0 %v338
    %433 = vmatpush1.bf16.msra.mxu0 %v337
    %434 = vmatprep.subr.bf16.mxu0 0
    %435 = vmatpush1.bf16.msra.mxu0 0
    %436 = vmatprep.subr.bf16.mxu0 0
    %437 = vmatpush1.bf16.msra.mxu0 0
    %438 = vmatprep.subr.bf16.mxu0 0
    %439 = vmatpush1.bf16.msra.mxu0 0
    %440 = vmatprep.subr.bf16.mxu0 0
    %441 = vmatpush1.bf16.msra.mxu0 0
    %442 = vmatprep.subr.bf16.mxu0 0
    %443 = vmatpush1.bf16.msra.mxu0 0
    %444 = vmatprep.subr.bf16.mxu0 0
    %445 = vmatpush1.bf16.msra.mxu0 0
    %446 = vmatprep.subr.bf16.mxu0 0
    %447 = vmatpush1.bf16.msra.mxu0 0
    %448 = vmatprep.subr.bf16.mxu0 0
    %449 = vmatpush1.bf16.msra.mxu0 0
    %450 = vmatprep.subr.bf16.mxu0 0
    %451 = vmatpush1.bf16.msra.mxu0 0
    %452 = vmatprep.subr.bf16.mxu0 0
    %453 = vmatpush1.bf16.msra.mxu0 0
    %454 = vmatprep.subr.bf16.mxu0 0
    %455 = vmatpush1.bf16.msra.mxu0 0
    %456 = vmatprep.subr.bf16.mxu0 0
    %457 = vmatpush1.bf16.msra.mxu0 0
    %458 = vmatprep.mubr.bf16.mxu0 0
    %459 = vmatmul.mubr.bf16.gmra.mrb[0].mxu0 %v424
    %v460 = vpop.f32.mrb[0].mxu0
    %v461 = vadd.f32 0.0, %v460
    %v462 = vpop.f32.mrb[0].mxu0
    %v463 = vadd.f32 0.0, %v462
    %v464 = vpop.f32.mrb[0].mxu0
    %v465 = vpop.f32.mrb[0].mxu0
    %466 = vdwg.mxu0
    %v467 = vadd.f32 %v420, %v461
    %v468 = vadd.f32 %v421, %v463
    %v469 = vmul.f32 %v467, 0.5
    %v470 = vmul.f32 %v468, 0.5
    %v471 = vtanh.pop %v469
    %v472 = vtanh.pop %v470
    %v473 = vadd.f32 %v471, 1.0
    %v474 = vadd.f32 %v472, 1.0
    %v475 = vmul.f32 %v473, 0.5
    %v476 = vmul.f32 %v474, 0.5
    %v477 = vtanh.pop %v468
    %v478 = vmul.f32 %v475, %v413
    %480 = vrot.lane.b32.xlu0 %v477, 64
    %v481 = vpop.permute.xlu0 %480
    %v483 = vmul.f32 %v475, %v481
    %485 = vrot.lane.b32.xlu0 %v483, 64
    %v486 = vpop.permute.xlu0 %485
    %v488 = vadd.f32 %v478, %v486
    %v489 = vtanh.pop %v488
    %491 = vrot.lane.b32.xlu0 %v489, 64
    %v492 = vpop.permute.xlu0 %491
    %v494 = vmul.f32 %v476, %v492
    %v495 = vld [vmem:[#allocation2 + $0x20] sm:$0xff]
    %v496 = vld [vmem:[#allocation2 + $0x28] sm:$0xff]
    %v497 = vpack.c.bf16 %v494, %v494
    %v499 = vsel %vm347, %v497, 0
    %501 = vmatprep.subr.bf16.mxu0 %v332
    %502 = vmatpush1.bf16.msra.mxu0 %v331
    %503 = vmatprep.subr.bf16.mxu0 %v334
    %504 = vmatpush1.bf16.msra.mxu0 %v333
    %505 = vmatprep.subr.bf16.mxu0 %v336
    %506 = vmatpush1.bf16.msra.mxu0 %v335
    %507 = vmatprep.subr.bf16.mxu0 %v338
    %508 = vmatpush1.bf16.msra.mxu0 %v337
    %509 = vmatprep.subr.bf16.mxu0 0
    %510 = vmatpush1.bf16.msra.mxu0 0
    %511 = vmatprep.subr.bf16.mxu0 0
    %512 = vmatpush1.bf16.msra.mxu0 0
    %513 = vmatprep.subr.bf16.mxu0 0
    %514 = vmatpush1.bf16.msra.mxu0 0
    %515 = vmatprep.subr.bf16.mxu0 0
    %516 = vmatpush1.bf16.msra.mxu0 0
    %517 = vmatprep.subr.bf16.mxu0 0
    %518 = vmatpush1.bf16.msra.mxu0 0
    %519 = vmatprep.subr.bf16.mxu0 0
    %520 = vmatpush1.bf16.msra.mxu0 0
    %521 = vmatprep.subr.bf16.mxu0 0
    %522 = vmatpush1.bf16.msra.mxu0 0
    %523 = vmatprep.subr.bf16.mxu0 0
    %524 = vmatpush1.bf16.msra.mxu0 0
    %525 = vmatprep.subr.bf16.mxu0 0
    %526 = vmatpush1.bf16.msra.mxu0 0
    %527 = vmatprep.subr.bf16.mxu0 0
    %528 = vmatpush1.bf16.msra.mxu0 0
    %529 = vmatprep.subr.bf16.mxu0 0
    %530 = vmatpush1.bf16.msra.mxu0 0
    %531 = vmatprep.subr.bf16.mxu0 0
    %532 = vmatpush1.bf16.msra.mxu0 0
    %533 = vmatprep.mubr.bf16.mxu0 0
    %534 = vmatmul.mubr.bf16.gmra.mrb[0].mxu0 %v499
    %v535 = vpop.f32.mrb[0].mxu0
    %v536 = vadd.f32 0.0, %v535
    %v537 = vpop.f32.mrb[0].mxu0
    %v538 = vadd.f32 0.0, %v537
    %v539 = vpop.f32.mrb[0].mxu0
    %v540 = vpop.f32.mrb[0].mxu0
    %541 = vdwg.mxu0
    %v542 = vadd.f32 %v495, %v536
    %v543 = vadd.f32 %v496, %v538
    %v544 = vmul.f32 %v542, 0.5
    %v545 = vmul.f32 %v543, 0.5
    %v546 = vtanh.pop %v544
    %v547 = vtanh.pop %v545
    %v548 = vadd.f32 %v546, 1.0
    %v549 = vadd.f32 %v547, 1.0
    %v550 = vmul.f32 %v548, 0.5
    %v551 = vmul.f32 %v549, 0.5
    %v552 = vtanh.pop %v543
    %v553 = vmul.f32 %v550, %v488
    %555 = vrot.lane.b32.xlu0 %v552, 64
    %v556 = vpop.permute.xlu0 %555
    %v558 = vmul.f32 %v550, %v556
    %560 = vrot.lane.b32.xlu0 %v558, 64
    %v561 = vpop.permute.xlu0 %560
    %v563 = vadd.f32 %v553, %v561
    %v564 = vtanh.pop %v563
    %566 = vrot.lane.b32.xlu0 %v564, 64
    %v567 = vpop.permute.xlu0 %566
    %v569 = vmul.f32 %v551, %v567
    %v570 = vld [vmem:[#allocation2 + $0x30] sm:$0xff]
    %v571 = vld [vmem:[#allocation2 + $0x38] sm:$0xff]
    %v572 = vpack.c.bf16 %v569, %v569
    %v574 = vsel %vm347, %v572, 0
    %576 = vmatprep.subr.bf16.mxu0 %v332
    %577 = vmatpush1.bf16.msra.mxu0 %v331
    %578 = vmatprep.subr.bf16.mxu0 %v334
    %579 = vmatpush1.bf16.msra.mxu0 %v333
    %580 = vmatprep.subr.bf16.mxu0 %v336
    %581 = vmatpush1.bf16.msra.mxu0 %v335
    %582 = vmatprep.subr.bf16.mxu0 %v338
    %583 = vmatpush1.bf16.msra.mxu0 %v337
    %584 = vmatprep.subr.bf16.mxu0 0
    %585 = vmatpush1.bf16.msra.mxu0 0
    %586 = vmatprep.subr.bf16.mxu0 0
    %587 = vmatpush1.bf16.msra.mxu0 0
    %588 = vmatprep.subr.bf16.mxu0 0
    %589 = vmatpush1.bf16.msra.mxu0 0
    %590 = vmatprep.subr.bf16.mxu0 0
    %591 = vmatpush1.bf16.msra.mxu0 0
    %592 = vmatprep.subr.bf16.mxu0 0
    %593 = vmatpush1.bf16.msra.mxu0 0
    %594 = vmatprep.subr.bf16.mxu0 0
    %595 = vmatpush1.bf16.msra.mxu0 0
    %596 = vmatprep.subr.bf16.mxu0 0
    %597 = vmatpush1.bf16.msra.mxu0 0
    %598 = vmatprep.subr.bf16.mxu0 0
    %599 = vmatpush1.bf16.msra.mxu0 0
    %600 = vmatprep.subr.bf16.mxu0 0
    %601 = vmatpush1.bf16.msra.mxu0 0
    %602 = vmatprep.subr.bf16.mxu0 0
    %603 = vmatpush1.bf16.msra.mxu0 0
    %604 = vmatprep.subr.bf16.mxu0 0
    %605 = vmatpush1.bf16.msra.mxu0 0
    %606 = vmatprep.subr.bf16.mxu0 0
    %607 = vmatpush1.bf16.msra.mxu0 0
    %608 = vmatprep.mubr.bf16.mxu0 0
    %609 = vmatmul.mubr.bf16.gmra.mrb[0].mxu0 %v574
    %v610 = vpop.f32.mrb[0].mxu0
    %v611 = vadd.f32 0.0, %v610
    %v612 = vpop.f32.mrb[0].mxu0
    %v613 = vadd.f32 0.0, %v612
    %v614 = vpop.f32.mrb[0].mxu0
    %v615 = vpop.f32.mrb[0].mxu0
    %616 = vdwg.mxu0
    %v617 = vadd.f32 %v570, %v611
    %v618 = vadd.f32 %v571, %v613
    %v619 = vmul.f32 %v617, 0.5
    %v620 = vmul.f32 %v618, 0.5
    %v621 = vtanh.pop %v619
    %v622 = vtanh.pop %v620
    %v623 = vadd.f32 %v621, 1.0
    %v624 = vadd.f32 %v622, 1.0
    %v625 = vmul.f32 %v623, 0.5
    %v626 = vmul.f32 %v624, 0.5
    %v627 = vtanh.pop %v618
    %v628 = vmul.f32 %v625, %v563
    %630 = vrot.lane.b32.xlu0 %v627, 64
    %v631 = vpop.permute.xlu0 %630
    %v633 = vmul.f32 %v625, %v631
    %635 = vrot.lane.b32.xlu0 %v633, 64
    %v636 = vpop.permute.xlu0 %635
    %v638 = vadd.f32 %v628, %v636
    %v639 = vtanh.pop %v638
    %641 = vrot.lane.b32.xlu0 %v639, 64
    %v642 = vpop.permute.xlu0 %641
    %v644 = vmul.f32 %v626, %v642
    %v645 = vld [vmem:[#allocation2 + $0x40] sm:$0xff]
    %v646 = vld [vmem:[#allocation2 + $0x48] sm:$0xff]
    %v647 = vpack.c.bf16 %v644, %v644
    %v649 = vsel %vm347, %v647, 0
    %651 = vmatprep.subr.bf16.mxu0 %v332
    %652 = vmatpush1.bf16.msra.mxu0 %v331
    %653 = vmatprep.subr.bf16.mxu0 %v334
    %654 = vmatpush1.bf16.msra.mxu0 %v333
    %655 = vmatprep.subr.bf16.mxu0 %v336
    %656 = vmatpush1.bf16.msra.mxu0 %v335
    %657 = vmatprep.subr.bf16.mxu0 %v338
    %658 = vmatpush1.bf16.msra.mxu0 %v337
    %659 = vmatprep.subr.bf16.mxu0 0
    %660 = vmatpush1.bf16.msra.mxu0 0
    %661 = vmatprep.subr.bf16.mxu0 0
    %662 = vmatpush1.bf16.msra.mxu0 0
    %663 = vmatprep.subr.bf16.mxu0 0
    %664 = vmatpush1.bf16.msra.mxu0 0
    %665 = vmatprep.subr.bf16.mxu0 0
    %666 = vmatpush1.bf16.msra.mxu0 0
    %667 = vmatprep.subr.bf16.mxu0 0
    %668 = vmatpush1.bf16.msra.mxu0 0
    %669 = vmatprep.subr.bf16.mxu0 0
    %670 = vmatpush1.bf16.msra.mxu0 0
    %671 = vmatprep.subr.bf16.mxu0 0
    %672 = vmatpush1.bf16.msra.mxu0 0
    %673 = vmatprep.subr.bf16.mxu0 0
    %674 = vmatpush1.bf16.msra.mxu0 0
    %675 = vmatprep.subr.bf16.mxu0 0
    %676 = vmatpush1.bf16.msra.mxu0 0
    %677 = vmatprep.subr.bf16.mxu0 0
    %678 = vmatpush1.bf16.msra.mxu0 0
    %679 = vmatprep.subr.bf16.mxu0 0
    %680 = vmatpush1.bf16.msra.mxu0 0
    %681 = vmatprep.subr.bf16.mxu0 0
    %682 = vmatpush1.bf16.msra.mxu0 0
    %683 = vmatprep.mubr.bf16.mxu0 0
    %684 = vmatmul.mubr.bf16.gmra.mrb[0].mxu0 %v649
    %v685 = vpop.f32.mrb[0].mxu0
    %v686 = vadd.f32 0.0, %v685
    %v687 = vpop.f32.mrb[0].mxu0
    %v688 = vadd.f32 0.0, %v687
    %v689 = vpop.f32.mrb[0].mxu0
    %v690 = vpop.f32.mrb[0].mxu0
    %691 = vdwg.mxu0
    %v692 = vadd.f32 %v645, %v686
    %v693 = vadd.f32 %v646, %v688
    %v694 = vmul.f32 %v692, 0.5
    %v695 = vmul.f32 %v693, 0.5
    %v696 = vtanh.pop %v694
    %v697 = vtanh.pop %v695
    %v698 = vadd.f32 %v696, 1.0
    %v699 = vadd.f32 %v697, 1.0
    %v700 = vmul.f32 %v698, 0.5
    %v701 = vmul.f32 %v699, 0.5
    %v702 = vtanh.pop %v693
    %v703 = vmul.f32 %v700, %v638
    %705 = vrot.lane.b32.xlu0 %v702, 64
    %v706 = vpop.permute.xlu0 %705
    %v708 = vmul.f32 %v700, %v706
    %710 = vrot.lane.b32.xlu0 %v708, 64
    %v711 = vpop.permute.xlu0 %710
    %v713 = vadd.f32 %v703, %v711
    %v714 = vtanh.pop %v713
    %716 = vrot.lane.b32.xlu0 %v714, 64
    %v717 = vpop.permute.xlu0 %716
    %v719 = vmul.f32 %v701, %v717
    %v720 = vld [vmem:[#allocation2 + $0x50] sm:$0xff]
    %v721 = vld [vmem:[#allocation2 + $0x58] sm:$0xff]
    %v722 = vpack.c.bf16 %v719, %v719
    %v724 = vsel %vm347, %v722, 0
    %726 = vmatprep.subr.bf16.mxu0 %v332
    %727 = vmatpush1.bf16.msra.mxu0 %v331
    %728 = vmatprep.subr.bf16.mxu0 %v334
    %729 = vmatpush1.bf16.msra.mxu0 %v333
    %730 = vmatprep.subr.bf16.mxu0 %v336
    %731 = vmatpush1.bf16.msra.mxu0 %v335
    %732 = vmatprep.subr.bf16.mxu0 %v338
    %733 = vmatpush1.bf16.msra.mxu0 %v337
    %734 = vmatprep.subr.bf16.mxu0 0
    %735 = vmatpush1.bf16.msra.mxu0 0
    %736 = vmatprep.subr.bf16.mxu0 0
    %737 = vmatpush1.bf16.msra.mxu0 0
    %738 = vmatprep.subr.bf16.mxu0 0
    %739 = vmatpush1.bf16.msra.mxu0 0
    %740 = vmatprep.subr.bf16.mxu0 0
    %741 = vmatpush1.bf16.msra.mxu0 0
    %742 = vmatprep.subr.bf16.mxu0 0
    %743 = vmatpush1.bf16.msra.mxu0 0
    %744 = vmatprep.subr.bf16.mxu0 0
    %745 = vmatpush1.bf16.msra.mxu0 0
    %746 = vmatprep.subr.bf16.mxu0 0
    %747 = vmatpush1.bf16.msra.mxu0 0
    %748 = vmatprep.subr.bf16.mxu0 0
    %749 = vmatpush1.bf16.msra.mxu0 0
    %750 = vmatprep.subr.bf16.mxu0 0
    %751 = vmatpush1.bf16.msra.mxu0 0
    %752 = vmatprep.subr.bf16.mxu0 0
    %753 = vmatpush1.bf16.msra.mxu0 0
    %754 = vmatprep.subr.bf16.mxu0 0
    %755 = vmatpush1.bf16.msra.mxu0 0
    %756 = vmatprep.subr.bf16.mxu0 0
    %757 = vmatpush1.bf16.msra.mxu0 0
    %758 = vmatprep.mubr.bf16.mxu0 0
    %759 = vmatmul.mubr.bf16.gmra.mrb[0].mxu0 %v724
    %v760 = vpop.f32.mrb[0].mxu0
    %v761 = vadd.f32 0.0, %v760
    %v762 = vpop.f32.mrb[0].mxu0
    %v763 = vadd.f32 0.0, %v762
    %v764 = vpop.f32.mrb[0].mxu0
    %v765 = vpop.f32.mrb[0].mxu0
    %766 = vdwg.mxu0
    %v767 = vadd.f32 %v720, %v761
    %v768 = vadd.f32 %v721, %v763
    %v769 = vmul.f32 %v767, 0.5
    %v770 = vmul.f32 %v768, 0.5
    %v771 = vtanh.pop %v769
    %v772 = vtanh.pop %v770
    %v773 = vadd.f32 %v771, 1.0
    %v774 = vadd.f32 %v772, 1.0
    %v775 = vmul.f32 %v773, 0.5
    %v776 = vmul.f32 %v774, 0.5
    %v777 = vtanh.pop %v768
    %v778 = vmul.f32 %v775, %v713
    %780 = vrot.lane.b32.xlu0 %v777, 64
    %v781 = vpop.permute.xlu0 %780
    %v783 = vmul.f32 %v775, %v781
    %785 = vrot.lane.b32.xlu0 %v783, 64
    %v786 = vpop.permute.xlu0 %785
    %v788 = vadd.f32 %v778, %v786
    %v789 = vtanh.pop %v788
    %791 = vrot.lane.b32.xlu0 %v789, 64
    %v792 = vpop.permute.xlu0 %791
    %v794 = vmul.f32 %v776, %v792
    %v795 = vld [vmem:[#allocation2 + $0x60] sm:$0xff]
    %v796 = vld [vmem:[#allocation2 + $0x68] sm:$0xff]
    %v797 = vpack.c.bf16 %v794, %v794
    %v799 = vsel %vm347, %v797, 0
    %801 = vmatprep.subr.bf16.mxu0 %v332
    %802 = vmatpush1.bf16.msra.mxu0 %v331
    %803 = vmatprep.subr.bf16.mxu0 %v334
    %804 = vmatpush1.bf16.msra.mxu0 %v333
    %805 = vmatprep.subr.bf16.mxu0 %v336
    %806 = vmatpush1.bf16.msra.mxu0 %v335
    %807 = vmatprep.subr.bf16.mxu0 %v338
    %808 = vmatpush1.bf16.msra.mxu0 %v337
    %809 = vmatprep.subr.bf16.mxu0 0
    %810 = vmatpush1.bf16.msra.mxu0 0
    %811 = vmatprep.subr.bf16.mxu0 0
    %812 = vmatpush1.bf16.msra.mxu0 0
    %813 = vmatprep.subr.bf16.mxu0 0
    %814 = vmatpush1.bf16.msra.mxu0 0
    %815 = vmatprep.subr.bf16.mxu0 0
    %816 = vmatpush1.bf16.msra.mxu0 0
    %817 = vmatprep.subr.bf16.mxu0 0
    %818 = vmatpush1.bf16.msra.mxu0 0
    %819 = vmatprep.subr.bf16.mxu0 0
    %820 = vmatpush1.bf16.msra.mxu0 0
    %821 = vmatprep.subr.bf16.mxu0 0
    %822 = vmatpush1.bf16.msra.mxu0 0
    %823 = vmatprep.subr.bf16.mxu0 0
    %824 = vmatpush1.bf16.msra.mxu0 0
    %825 = vmatprep.subr.bf16.mxu0 0
    %826 = vmatpush1.bf16.msra.mxu0 0
    %827 = vmatprep.subr.bf16.mxu0 0
    %828 = vmatpush1.bf16.msra.mxu0 0
    %829 = vmatprep.subr.bf16.mxu0 0
    %830 = vmatpush1.bf16.msra.mxu0 0
    %831 = vmatprep.subr.bf16.mxu0 0
    %832 = vmatpush1.bf16.msra.mxu0 0
    %833 = vmatprep.mubr.bf16.mxu0 0
    %834 = vmatmul.mubr.bf16.gmra.mrb[0].mxu0 %v799
    %v835 = vpop.f32.mrb[0].mxu0
    %v836 = vadd.f32 0.0, %v835
    %v837 = vpop.f32.mrb[0].mxu0
    %v838 = vadd.f32 0.0, %v837
    %v839 = vpop.f32.mrb[0].mxu0
    %v840 = vpop.f32.mrb[0].mxu0
    %841 = vdwg.mxu0
    %v842 = vadd.f32 %v795, %v836
    %v843 = vadd.f32 %v796, %v838
    %v844 = vmul.f32 %v842, 0.5
    %v845 = vmul.f32 %v843, 0.5
    %v846 = vtanh.pop %v844
    %v847 = vtanh.pop %v845
    %v848 = vadd.f32 %v846, 1.0
    %v849 = vadd.f32 %v847, 1.0
    %v850 = vmul.f32 %v848, 0.5
    %v851 = vmul.f32 %v849, 0.5
    %v852 = vtanh.pop %v843
    %v853 = vmul.f32 %v850, %v788
    %855 = vrot.lane.b32.xlu0 %v852, 64
    %v856 = vpop.permute.xlu0 %855
    %v858 = vmul.f32 %v850, %v856
    %860 = vrot.lane.b32.xlu0 %v858, 64
    %v861 = vpop.permute.xlu0 %860
    %v863 = vadd.f32 %v853, %v861
    %v864 = vtanh.pop %v863
    %866 = vrot.lane.b32.xlu0 %v864, 64
    %v867 = vpop.permute.xlu0 %866
    %v869 = vmul.f32 %v851, %v867
    %v870 = vld [vmem:[#allocation2 + $0x70] sm:$0xff]
    %v871 = vld [vmem:[#allocation2 + $0x78] sm:$0xff]
    %v872 = vpack.c.bf16 %v869, %v869
    %v874 = vsel %vm347, %v872, 0
    %876 = vmatprep.subr.bf16.mxu0 %v332
    %877 = vmatpush1.bf16.msra.mxu0 %v331
    %878 = vmatprep.subr.bf16.mxu0 %v334
    %879 = vmatpush1.bf16.msra.mxu0 %v333
    %880 = vmatprep.subr.bf16.mxu0 %v336
    %881 = vmatpush1.bf16.msra.mxu0 %v335
    %882 = vmatprep.subr.bf16.mxu0 %v338
    %883 = vmatpush1.bf16.msra.mxu0 %v337
    %884 = vmatprep.subr.bf16.mxu0 0
    %885 = vmatpush1.bf16.msra.mxu0 0
    %886 = vmatprep.subr.bf16.mxu0 0
    %887 = vmatpush1.bf16.msra.mxu0 0
    %888 = vmatprep.subr.bf16.mxu0 0
    %889 = vmatpush1.bf16.msra.mxu0 0
    %890 = vmatprep.subr.bf16.mxu0 0
    %891 = vmatpush1.bf16.msra.mxu0 0
    %892 = vmatprep.subr.bf16.mxu0 0
    %893 = vmatpush1.bf16.msra.mxu0 0
    %894 = vmatprep.subr.bf16.mxu0 0
    %895 = vmatpush1.bf16.msra.mxu0 0
    %896 = vmatprep.subr.bf16.mxu0 0
    %897 = vmatpush1.bf16.msra.mxu0 0
    %898 = vmatprep.subr.bf16.mxu0 0
    %899 = vmatpush1.bf16.msra.mxu0 0
    %900 = vmatprep.subr.bf16.mxu0 0
    %901 = vmatpush1.bf16.msra.mxu0 0
    %902 = vmatprep.subr.bf16.mxu0 0
    %903 = vmatpush1.bf16.msra.mxu0 0
    %904 = vmatprep.subr.bf16.mxu0 0
    %905 = vmatpush1.bf16.msra.mxu0 0
    %906 = vmatprep.subr.bf16.mxu0 0
    %907 = vmatpush1.bf16.msra.mxu0 0
    %908 = vmatprep.mubr.bf16.mxu0 0
    %909 = vmatmul.mubr.bf16.gmra.mrb[0].mxu0 %v874
    %v910 = vpop.f32.mrb[0].mxu0
    %v911 = vadd.f32 0.0, %v910
    %v912 = vpop.f32.mrb[0].mxu0
    %v913 = vadd.f32 0.0, %v912
    %v914 = vpop.f32.mrb[0].mxu0
    %v915 = vpop.f32.mrb[0].mxu0
    %916 = vdwg.mxu0
    %v917 = vadd.f32 %v870, %v911
    %v918 = vadd.f32 %v871, %v913
    %v919 = vmul.f32 %v917, 0.5
    %v920 = vmul.f32 %v918, 0.5
    %v921 = vtanh.pop %v919
    %v922 = vtanh.pop %v920
    %v923 = vadd.f32 %v921, 1.0
    %v924 = vadd.f32 %v922, 1.0
    %v925 = vmul.f32 %v923, 0.5
    %v926 = vmul.f32 %v924, 0.5
    %v927 = vtanh.pop %v918
    %v928 = vmul.f32 %v925, %v863
    %930 = vrot.lane.b32.xlu0 %v927, 64
    %v931 = vpop.permute.xlu0 %930
    %v933 = vmul.f32 %v925, %v931
    %935 = vrot.lane.b32.xlu0 %v933, 64
    %v936 = vpop.permute.xlu0 %935
    %v938 = vadd.f32 %v928, %v936
    %v939 = vtanh.pop %v938
    %941 = vrot.lane.b32.xlu0 %v939, 64
    %v942 = vpop.permute.xlu0 %941
    %v944 = vmul.f32 %v926, %v942
    %v945 = vpack.c.bf16 %v944, %v944
    %v946 = vld [vmem:[%s4] sm:$0xf]
    %v947 = vld [vmem:[%s4 + $0x4] sm:$0xf]
    %v948 = vld [vmem:[%s4 + $0x8] sm:$0xf]
    %v949 = vld [vmem:[%s4 + $0xc] sm:$0xf]
    %v950 = vld [vmem:[%s4 + $0x10] sm:$0xf]
    %v951 = vld [vmem:[%s4 + $0x14] sm:$0xf]
    %v952 = vld [vmem:[%s4 + $0x18] sm:$0xf]
    %v953 = vld [vmem:[%s4 + $0x1c] sm:$0xf]
    %v954 = vld [vmem:[%s5] sm:$0x1]
    %v956 = vlaneseq
    %v957 = vshrl.u32 %v956, 7
    %v958 = vsub.s32 0, %v957
    %v959 = vrot.slane %v954, %v958
    %v969 = vunpack.c.l.b16 %v946
    %v970 = vunpack.c.l.b16 %v947
    %v971 = vunpack.c.l.b16 %v948
    %v972 = vunpack.c.l.b16 %v949
    %v973 = vunpack.c.l.b16 %v950
    %v974 = vunpack.c.l.b16 %v951
    %v975 = vunpack.c.l.b16 %v952
    %v976 = vunpack.c.l.b16 %v953
    %v977 = vpack.c.b16 %v970, %v969
    %v978 = vpack.c.b16 %v972, %v971
    %v979 = vpack.c.b16 %v974, %v973
    %v980 = vpack.c.b16 %v976, %v975
    %v986 = vsel %vm347, %v945, 0
    %988 = vmatprep.subr.bf16.mxu0 0
    %989 = vmatpush1.bf16.msra.mxu0 %v977
    %990 = vmatprep.subr.bf16.mxu0 0
    %991 = vmatpush1.bf16.msra.mxu0 %v978
    %992 = vmatprep.subr.bf16.mxu0 0
    %993 = vmatpush1.bf16.msra.mxu0 %v979
    %994 = vmatprep.subr.bf16.mxu0 0
    %995 = vmatpush1.bf16.msra.mxu0 %v980
    %996 = vmatprep.subr.bf16.mxu0 0
    %997 = vmatpush1.bf16.msra.mxu0 0
    %998 = vmatprep.subr.bf16.mxu0 0
    %999 = vmatpush1.bf16.msra.mxu0 0
    %1000 = vmatprep.subr.bf16.mxu0 0
    %1001 = vmatpush1.bf16.msra.mxu0 0
    %1002 = vmatprep.subr.bf16.mxu0 0
    %1003 = vmatpush1.bf16.msra.mxu0 0
    %1004 = vmatprep.subr.bf16.mxu0 0
    %1005 = vmatpush1.bf16.msra.mxu0 0
    %1006 = vmatprep.subr.bf16.mxu0 0
    %1007 = vmatpush1.bf16.msra.mxu0 0
    %1008 = vmatprep.subr.bf16.mxu0 0
    %1009 = vmatpush1.bf16.msra.mxu0 0
    %1010 = vmatprep.subr.bf16.mxu0 0
    %1011 = vmatpush1.bf16.msra.mxu0 0
    %1012 = vmatprep.subr.bf16.mxu0 0
    %1013 = vmatpush1.bf16.msra.mxu0 0
    %1014 = vmatprep.subr.bf16.mxu0 0
    %1015 = vmatpush1.bf16.msra.mxu0 0
    %1016 = vmatprep.subr.bf16.mxu0 0
    %1017 = vmatpush1.bf16.msra.mxu0 0
    %1018 = vmatprep.subr.bf16.mxu0 0
    %1019 = vmatpush1.bf16.msra.mxu0 0
    %1020 = vmatprep.mubr.bf16.mxu0 0
    %1021 = vmatmul.mubr.bf16.gmra.mrb[0].mxu0 %v986
    %v1022 = vpop.f32.mrb[0].mxu0
    %v1023 = vadd.f32 %v959, %v1022
    %v1024 = vpop.f32.mrb[0].mxu0
    %v1025 = vpop.f32.mrb[0].mxu0
    %v1026 = vpop.f32.mrb[0].mxu0
    %1027 = vdwg.mxu0
    %1028 = vst [vmem:[%s6] sm:$0xff] %v1023
    // Predicated region
    $region30: #{rnn_forward.1} parent=1 // pred_check
      _
    $region31: #{rnn_forward.1} parent=1 // pred_check_branch
      %1030 = sbr.rel (0) target = $region33
    $region32: #{rnn_forward.1} parent=1 // pred_region
      _
    $region33: #{rnn_forward.1} parent=1 // pred_fallthru
      _
    // Predicated region
    $region34: #{rnn_forward.1} parent=1 // pred_check
      _
    $region35: #{rnn_forward.1} parent=1 // pred_check_branch
      %1032 = sbr.rel (0) target = $region37
    $region36: #{rnn_forward.1} parent=1 // pred_region
      _
    $region37: #{rnn_forward.1} parent=1 // pred_fallthru
      _
    %1033 = vsyncpa [#allocation4], 1

</llo_original>
